<compile_context>
chip_gen: v7x
topology: tpu7x:2x2x1
jax: 0.10.0
libtpu: 0.0.40
codegen_flags: <defaults>
</compile_context>

<pallas_src>
import functools

import jax
import jax.numpy as jnp
from jax import lax
from jax.experimental import pallas as pl
from jax.experimental.pallas import tpu as pltpu

EPS = 1e-5                       # torch.nn.BatchNorm1d default
_FUSED_SLAB_LIMIT = 4 << 20      # f32 slab footprint that takes the fused path
_TILE_BYTES_F32 = 4 << 20        # tiled-path tile target (f32-equivalent)
_VMEM_LIMIT = 48 << 20           # scoped VMEM request (v7x physical = 64 MiB)
_MAX_NATURAL_COLS = 16384        # widest natural (B, T) layout we tile directly


def _round_up(v, m):
    return ((v + m - 1) // m) * m


# --------------------------- fused single-pass ------------------------------

def _fused_kernel(gb_ref, x_ref, o_ref, *, n):
    """Whole-slab BN: stats + normalize in one VMEM-resident pass (1R + 1W)."""
    x = x_ref[...].astype(jnp.float32)
    inv_n = 1.0 / n
    mean = jnp.sum(x) * inv_n
    xc = x - mean
    var = jnp.sum(xc * xc) * inv_n               # biased variance (training BN)
    scale = lax.rsqrt(var + EPS) * gb_ref[0]     # rsqrt on EUP
    o_ref[...] = (xc * scale + gb_ref[1]).astype(o_ref.dtype)


def _run_fused(x2d, gb, n):
    rows, cols = x2d.shape
    return pl.pallas_call(
        functools.partial(_fused_kernel, n=n),
        grid=(1,),
        in_specs=[
            pl.BlockSpec(memory_space=pltpu.MemorySpace.SMEM),       # (gamma, beta)
            pl.BlockSpec((rows, cols), lambda i: (0, 0)),            # whole slab
        ],
        out_specs=pl.BlockSpec((rows, cols), lambda i: (0, 0)),
        out_shape=jax.ShapeDtypeStruct((rows, cols), x2d.dtype),
        compiler_params=pltpu.CompilerParams(
            dimension_semantics=("arbitrary",),
            vmem_limit_bytes=_VMEM_LIMIT),
    )(gb, x2d)


# ------------------------------ tiled path -----------------------------------

def _reduce_kernel(c_ref, x_ref, sum_ref, sq_ref, *,
                   tile_rows, cols, steps, full_rows, rem_cols, need_mask):
    """Accumulate per-slice partial sums of (x - c) and (x - c)^2."""
    p = pl.program_id(0)           # "parallel" slice (one per v7x TensorCore)
    i = pl.program_id(1)           # serial step within the slice

    @pl.when(i == 0)
    def _init():
        sum_ref[...] = jnp.zeros_like(sum_ref)
        sq_ref[...] = jnp.zeros_like(sq_ref)

    c = c_ref[0]                                     # SMEM scalar, read once
    x = x_ref[...].astype(jnp.float32) - c           # shifted -> stable variance

    if need_mask:
        # Mask rows/cols beyond the valid flat length (partial last tile,
        # clamped overhang tile of the parallel split, or rare tail pad).
        row0 = (p * steps + i) * tile_rows           # UNclamped logical origin
        grow = row0 + lax.broadcasted_iota(jnp.int32, (tile_rows, 1), 0)
        if rem_cols:
            gcol = lax.broadcasted_iota(jnp.int32, (1, cols), 1)
            valid = (grow < full_rows) | ((grow == full_rows) & (gcol < rem_cols))
        else:
            valid = grow < full_rows
        x = jnp.where(valid, x, 0.0)

    # Leading-axis sums are plain cross-vreg VPU adds; the single expensive
    # cross-lane/sublane collapse happens exactly once, in the wrapper.
    xf = x.reshape(tile_rows // 8, 8, cols)
    sum_ref[0] += jnp.sum(xf, axis=0)
    sq_ref[0] += jnp.sum(xf * xf, axis=0)


def _normalize_kernel(ss_ref, x_ref, o_ref):
    """y = x * scale + shift with precomputed scalars (2 VALU ops/element)."""
    o_ref[...] = (x_ref[...].astype(jnp.float32) * ss_ref[0]
                  + ss_ref[1]).astype(o_ref.dtype)


def _pick_tile_rows(rows, cols, tile_bytes_f32):
    per_row = cols * 4
    tr = max(1, tile_bytes_f32 // per_row)
    tr = min(int(tr), rows)
    return max(8, (tr // 8) * 8)                      # always a multiple of 8


def _run_tiled(x2d, gb, n, tile_bytes_f32):
    rows, cols = x2d.shape
    tile_rows = _pick_tile_rows(rows, cols, tile_bytes_f32)
    num_tiles = pl.cdiv(rows, tile_rows)
    num_slices = 2 if num_tiles >= 2 else 1           # per-TensorCore on v7x
    steps = pl.cdiv(num_tiles, num_slices)

    full_rows, rem_cols = divmod(n, cols)              # valid-region descriptor
    need_mask = (rem_cols != 0 or rows % tile_rows != 0
                 or num_tiles % num_slices != 0)

    # Shift constant c ~ a data value (stable shifted-variance formula).
    c = x2d[0, 0].astype(jnp.float32).reshape(1)

    def x_index(pi, ii):
        # Clamp the (possibly) overhanging last step of the parallel split;
        # its contribution is fully masked inside the kernel.
        return (jnp.minimum(pi * steps + ii, num_tiles - 1), 0)

    # ---- Pass 1: partial sums of (x - c) and (x - c)^2. ----
    psum, psq = pl.pallas_call(
        functools.partial(_reduce_kernel, tile_rows=tile_rows, cols=cols,
                          steps=steps, full_rows=full_rows, rem_cols=rem_cols,
                          need_mask=need_mask),
        grid=(num_slices, steps),
        in_specs=[
            pl.BlockSpec(memory_space=pltpu.MemorySpace.SMEM),       # c
            pl.BlockSpec((tile_rows, cols), x_index),                # x tile
        ],
        out_specs=(
            pl.BlockSpec((1, 8, cols), lambda pi, ii: (pi, 0, 0)),   # resident
            pl.BlockSpec((1, 8, cols), lambda pi, ii: (pi, 0, 0)),   # resident
        ),
        out_shape=(
            jax.ShapeDtypeStruct((num_slices, 8, cols), jnp.float32),
            jax.ShapeDtypeStruct((num_slices, 8, cols), jnp.float32),
        ),
        compiler_params=pltpu.CompilerParams(
            dimension_semantics=("parallel", "arbitrary"),
            vmem_limit_bytes=_VMEM_LIMIT),
    )(c, x2d)

    # One cheap cross-lane collapse + scalar math in XLA (outside the kernel).
    s = jnp.sum(psum)                                  # sum(x - c)
    q = jnp.sum(psq)                                   # sum((x - c)^2)
    mean_c = s / n
    mean = c[0] + mean_c
    var = jnp.maximum(q / n - mean_c * mean_c, 0.0)    # biased variance
    inv = lax.rsqrt(var + EPS)
    scale = inv * gb[0]
    shift = gb[1] - mean * scale
    scale_shift = jnp.stack([scale, shift])            # (2,) f32 for SMEM

    # ---- Pass 2: y = x * scale + shift (any tail garbage is dropped). ----
    out2d = pl.pallas_call(
        _normalize_kernel,
        grid=(num_tiles,),
        in_specs=[
            pl.BlockSpec(memory_space=pltpu.MemorySpace.SMEM),       # scale/shift
            pl.BlockSpec((tile_rows, cols), lambda i: (i, 0)),
        ],
        out_specs=pl.BlockSpec((tile_rows, cols), lambda i: (i, 0)),
        out_shape=jax.ShapeDtypeStruct((rows, cols), x2d.dtype),
        compiler_params=pltpu.CompilerParams(
            dimension_semantics=("parallel",),          # megacore-shardable
            vmem_limit_bytes=_VMEM_LIMIT),
    )(scale_shift, x2d)
    return out2d


# -------------------------------- wrapper ------------------------------------

def _layout(x, B, T):
    """Free 2D view of the flat data; pads the tail only in a rare fallback."""
    n = B * T
    for lane_w in (1024, 512, 256, 128):
        if n % lane_w == 0:                            # lane-packed slab, no copy
            return x.reshape(n // lane_w, lane_w), False
    if T <= _MAX_NATURAL_COLS:                         # natural (B, T), no copy
        return x.reshape(B, T), False
    # Rare fallback (huge non-128-divisible T): pad the flat tail.  Costs one
    # extra HBM round trip of x; never hit for typical trx_encoder shapes.
    lane_w = 1024
    rows = pl.cdiv(n, lane_w)
    flat = x.reshape(n)
    flat = jnp.concatenate([flat, jnp.zeros((rows * lane_w - n,), flat.dtype)])
    return flat.reshape(rows, lane_w), True


def rbatchnorm(x, gamma, beta, *,
               fused_slab_limit=_FUSED_SLAB_LIMIT,
               tile_bytes_f32=_TILE_BYTES_F32):
    """x: (B, T, 1) -> (B, T, 1), BatchNorm1d(1) training-mode forward."""
    B, T, _ = x.shape
    n = B * T
    x2d, padded = _layout(x, B, T)
    rows, cols = x2d.shape
    gb = jnp.concatenate([gamma.reshape(1), beta.reshape(1)]).astype(jnp.float32)

    # f32 VMEM footprint of the whole slab including layout padding.
    slab_f32 = _round_up(rows, 8) * _round_up(cols, 128) * 4
    use_fused = (not padded) and (slab_f32 <= fused_slab_limit or rows < 8)

    if use_fused:
        out2d = _run_fused(x2d, gb, n)
    else:
        out2d = _run_tiled(x2d, gb, n, tile_bytes_f32)

    if padded:
        return out2d.reshape(-1)[:n].reshape(B, T, 1)
    return out2d.reshape(B, T, 1)


def rbatchnorm_ref(x, gamma, beta):
    """Pure-JAX reference of BatchNorm1d(1) training-mode on (B*T, 1)."""
    flat = x.reshape(-1).astype(jnp.float32)
    mean = jnp.mean(flat)
    var = jnp.mean((flat - mean) ** 2)
    y = (flat - mean) * lax.rsqrt(var + EPS) * gamma[0] + beta[0]
    return y.reshape(x.shape).astype(x.dtype)


if __name__ == "__main__":
    key = jax.random.PRNGKey(0)

    # BatchNorm1d(1) parameters (PyTorch defaults: weight=1, bias=0).
    gamma = jnp.ones((1,), dtype=jnp.float32)
    beta = jnp.zeros((1,), dtype=jnp.float32)
    # TODO(synk): running_mean/running_var buffer updates are training-time
    # state and do not affect the training-mode forward output; not modeled.

    # 1) Small (B, T, 1) input matching the module layout -> fused path.
    x = jax.random.normal(key, (2, 8, 1), dtype=jnp.float32)
    out = jax.block_until_ready(rbatchnorm(x, gamma, beta))
    assert out.shape == (2, 8, 1)
    assert jnp.allclose(out, rbatchnorm_ref(x, gamma, beta), atol=1e-5, rtol=1e-5)

    # 2) Fused path, natural (B, T) layout with non-128-multiple T.
    x = jax.random.normal(jax.random.PRNGKey(1), (4, 700, 1), jnp.float32) * 3.0 + 5.0
    out = jax.block_until_ready(rbatchnorm(x, gamma, beta))
    assert jnp.allclose(out, rbatchnorm_ref(x, gamma, beta), atol=1e-4, rtol=1e-4)

    # 3) Forced tiled path: lane-packed layout, one tile per "parallel" slice.
    x = jax.random.normal(jax.random.PRNGKey(2), (8, 4096, 1), jnp.float32) * 2.0 + 1.0
    out = jax.block_until_ready(
        rbatchnorm(x, gamma, beta, fused_slab_limit=0, tile_bytes_f32=64 << 10))
    assert jnp.allclose(out, rbatchnorm_ref(x, gamma, beta), atol=1e-4, rtol=1e-4)

    # 4) Forced tiled path: natural layout, partial last tile -> row masking.
    x = jax.random.normal(jax.random.PRNGKey(3), (13, 700, 1), jnp.float32) * 0.5 - 2.0
    out = jax.block_until_ready(
        rbatchnorm(x, gamma, beta, fused_slab_limit=0, tile_bytes_f32=16 << 10))
    assert jnp.allclose(out, rbatchnorm_ref(x, gamma, beta), atol=1e-4, rtol=1e-4)

    # 5) Rare padded fallback (huge, non-128-divisible T) -> flat-index masking.
    x = jax.random.normal(jax.random.PRNGKey(4), (1, 16511, 1), jnp.float32)
    out = jax.block_until_ready(rbatchnorm(x, gamma, beta))
    assert out.shape == (1, 16511, 1)
    assert jnp.allclose(out, rbatchnorm_ref(x, gamma, beta), atol=1e-4, rtol=1e-4)

    # 6) bf16 input through the fused path (output stays bf16).
    x = (jax.random.normal(jax.random.PRNGKey(5), (4, 333, 1), jnp.float32)
         .astype(jnp.bfloat16))
    out = jax.block_until_ready(rbatchnorm(x, gamma, beta))
    assert out.dtype == jnp.bfloat16
    assert jnp.allclose(out.astype(jnp.float32),
                        rbatchnorm_ref(x, gamma, beta).astype(jnp.float32),
                        atol=3e-2, rtol=3e-2)

    print("KERNEL_OK")
</pallas_src>

<mosaic_0001>
module attributes {stable_mosaic.version = 11 : i64} {
  func.func @_fused_kernel(%arg0: i32, %arg1: memref<2xf32, #tpu.memory_space<smem>>, %arg2: memref<2x8xf32, #tpu.memory_space<vmem>>, %arg3: memref<2x8xf32, #tpu.memory_space<vmem>>) attributes {dimension_semantics = [#tpu.dimension_semantics<arbitrary>], iteration_bounds = array<i64: 1>, scalar_prefetch = 0 : i64, scratch_operands = 0 : i64, tpu.core_type = #tpu.core_type<tc>, window_params = [{transform_indices = @transform_0, window_bounds = array<i64: 2>}, {pipeline_mode = #tpu.pipeline_mode<synchronous>, transform_indices = @transform_1, window_bounds = array<i64: 2, 8>}, {pipeline_mode = #tpu.pipeline_mode<synchronous>, transform_indices = @transform_2, window_bounds = array<i64: 2, 8>}]} {
    %c0 = arith.constant 0 : index
    %c0_0 = arith.constant 0 : index
    %0 = vector.load %arg2[%c0, %c0_0] : memref<2x8xf32, #tpu.memory_space<vmem>>, vector<2x8xf32>
    %1 = vector.shape_cast %0 : vector<2x8xf32> to vector<1x2x8xf32>
    %cst = arith.constant dense<0.000000e+00> : vector<1xf32>
    %2 = vector.multi_reduction <add>, %1, %cst [1, 2] : vector<1x2x8xf32> to vector<1xf32>
    %3 = vector.shape_cast %2 : vector<1xf32> to vector<1x1x1xf32>
    %4 = vector.extract %3[0, 0, 0] : f32 from vector<1x1x1xf32>
    %cst_1 = arith.constant 6.250000e-02 : f32
    %5 = arith.mulf %4, %cst_1 : f32
    %6 = vector.broadcast %5 : f32 to vector<2x8xf32>
    %7 = arith.subf %0, %6 : vector<2x8xf32>
    %8 = arith.mulf %7, %7 : vector<2x8xf32>
    %9 = vector.shape_cast %8 : vector<2x8xf32> to vector<1x2x8xf32>
    %cst_2 = arith.constant dense<0.000000e+00> : vector<1xf32>
    %10 = vector.multi_reduction <add>, %9, %cst_2 [1, 2] : vector<1x2x8xf32> to vector<1xf32>
    %11 = vector.shape_cast %10 : vector<1xf32> to vector<1x1x1xf32>
    %12 = vector.extract %11[0, 0, 0] : f32 from vector<1x1x1xf32>
    %cst_3 = arith.constant 6.250000e-02 : f32
    %13 = arith.mulf %12, %cst_3 : f32
    %cst_4 = arith.constant 9.99999974E-6 : f32
    %14 = arith.addf %13, %cst_4 : f32
    %15 = math.rsqrt %14 : f32
    %c0_5 = arith.constant 0 : index
    %16 = memref.load %arg1[%c0_5] : memref<2xf32, #tpu.memory_space<smem>>
    %17 = arith.mulf %15, %16 : f32
    %18 = vector.broadcast %17 : f32 to vector<2x8xf32>
    %19 = arith.mulf %7, %18 : vector<2x8xf32>
    %c1 = arith.constant 1 : index
    %20 = memref.load %arg1[%c1] : memref<2xf32, #tpu.memory_space<smem>>
    %21 = vector.broadcast %20 : f32 to vector<2x8xf32>
    %22 = arith.addf %19, %21 : vector<2x8xf32>
    %c0_6 = arith.constant 0 : index
    %c0_7 = arith.constant 0 : index
    %23 = vector.load %arg3[%c0_6, %c0_7] : memref<2x8xf32, #tpu.memory_space<vmem>>, vector<2x8xf32>
    tpu.vector_store %arg3[%c0_6, %c0_7], %22 {strides = array<i32>} : memref<2x8xf32, #tpu.memory_space<vmem>>, vector<2x8xf32>,
    return
  }
  func.func @transform_0(%arg0: i32) -> i32 {
    %c0_i32 = arith.constant 0 : i32
    %c0_i32_0 = arith.constant 0 : i32
    return %c0_i32 : i32
  }
  func.func @transform_1(%arg0: i32) -> (i32, i32) {
    %c0_i32 = arith.constant 0 : i32
    %c0_i32_0 = arith.constant 0 : i32
    %c0_i32_1 = arith.constant 0 : i32
    return %c0_i32, %c0_i32_0 : i32, i32
  }
  func.func @transform_2(%arg0: i32) -> (i32, i32) {
    %c0_i32 = arith.constant 0 : i32
    %c0_i32_0 = arith.constant 0 : i32
    %c0_i32_1 = arith.constant 0 : i32
    return %c0_i32, %c0_i32_0 : i32, i32
  }
}

</mosaic_0001>

<llo_original>
// kernel: tpu_custom_call.1
$region0: #{tpu_custom_call.1}
  #allocation0 [shape = 'u32[]', space=smem, size = 0x4, offset = 0x4, fixed_abs, tag = 'smem constant byte address 0x4 - core index']
  #allocation1 [shape = 'u32[144,128]{1,0:T(1,128)}', space=vmem, size = 0x12000, scoped, tag = 'internal scratch']
  %s0 = inlined_call_operand.hbm [shape: f32[2], index: 0, kind: input, shape index: {}]
  %s1 = inlined_call_operand.vmem [shape: f32[2,8], index: 1, kind: input, shape index: {}]
  %s2 = inlined_call_operand.hbm [shape: f32[2,8], index: 2, kind: output, shape index: {}]
  %s3 = sld [smem:[#allocation0]]
  $region22: #{tpu_custom_call.1} parent=0
    _
  %s5 = ssub.s32 1, %s3
  %s6 = scalar_select 0, %s5, %s3
  $region1: #{tpu_custom_call.1} parent=0
    #allocation2 [shape = 'u8[512]{0}', space=smem, size = 0x200, scoped, tag = 'input window, operand 0, single buffered']
    #allocation3 [shape = 's32[1]{0}', space=sflag, size = 0x4, scoped, tag = 'scoped memory for tpu_custom_call.1']
    #allocation4 [shape = 's32[1]{0}', space=sflag, size = 0x4, scoped, tag = 'scoped memory for tpu_custom_call.1']
    #allocation5 [shape = 'u8[1024]{0}', space=vmem, size = 0x400, scoped, tag = 'output window, operand 0, single buffered']
    %7 = vsyncpa [#allocation4], 0
    %8 = vsyncpa [#allocation3], 0
    // Predicated region
    $region2: #{tpu_custom_call.1} parent=1 // pred_check
      _
    $region3: #{tpu_custom_call.1} parent=1 // pred_check_branch
      %10 = sbr.rel (0) target = $region5
    $region4: #{tpu_custom_call.1} parent=1 // pred_region
      %s12 = ssub.s32 16, 16
      %13 = vsyncadd [#allocation4], %s12
      %16 = dma.hbm_to_smem %s0, 16, [#allocation2], [#allocation4]
    $region5: #{tpu_custom_call.1} parent=1 // pred_fallthru
      _
    // Predicated region
    $region6: #{tpu_custom_call.1} parent=1 // pred_check
      _
    $region7: #{tpu_custom_call.1} parent=1 // pred_check_branch
      %18 = sbr.rel (0) target = $region9
    $region8: #{tpu_custom_call.1} parent=1 // pred_region
      _
    $region9: #{tpu_custom_call.1} parent=1 // pred_fallthru
      _
    // Predicated region
    $region10: #{tpu_custom_call.1} parent=1 // pred_check
      _
    $region11: #{tpu_custom_call.1} parent=1 // pred_check_branch
      %20 = sbr.rel (0) target = $region13
    $region12: #{tpu_custom_call.1} parent=1 // pred_region
      %21 = dma.done [#allocation4], 16
    $region13: #{tpu_custom_call.1} parent=1 // pred_fallthru
      _
    %22 = sfence
    %v23 = vld [vmem:[%s1] sm:$0x3]
    %vm24 = vcmask 58368
    %v25 = vsel %vm24, %v23, 0.0
    %26 = vadd.xlane.f32.xlu0 %v25
    %v27 = vpop.xlane.xlu0 %26
    %v28 = vrot.slane %v27, 4
    %v29 = vadd.f32 %v27, %v28
    %v30 = vrot.slane %v29, 2
    %v31 = vadd.f32 %v29, %v30
    %v32 = vrot.slane %v31, 1
    %v33 = vadd.f32 %v31, %v32
    %s34 = vtos %v33
    %s35 = smul.f32 %s34, 0.0625
    %v36 = vstv %s35
    %v37 = vsub.f32 %v23, %v36
    %v38 = vmul.f32 %v37, %v37
    %v39 = vsel %vm24, %v38, 0.0
    %40 = vadd.xlane.f32.xlu0 %v39
    %v41 = vpop.xlane.xlu0 %40
    %v42 = vrot.slane %v41, 4
    %v43 = vadd.f32 %v41, %v42
    %v44 = vrot.slane %v43, 2
    %v45 = vadd.f32 %v43, %v44
    %v46 = vrot.slane %v45, 1
    %v47 = vadd.f32 %v45, %v46
    %s48 = vtos %v47
    %s49 = smul.f32 %s48, 0.0625
    %s50 = sadd.f32 %s49, 1e-05
    %v51 = vstv %s50
    %v52 = vrsqrt.pop %v51
    %s53 = vtos %v52
    %s54 = sld [smem:[#allocation2]]
    %s55 = smul.f32 %s53, %s54
    %v56 = vstv %s55
    %v57 = vmul.f32 %v37, %v56
    %s58 = sld [smem:[#allocation2 + $0x1]]
    %v59 = vstv %s58
    %v60 = vadd.f32 %v57, %v59
    %61 = vst.msk [vmem:[#allocation5] sm:$0x3] %vm24, %v60
    // Predicated region
    $region14: #{tpu_custom_call.1} parent=1 // pred_check
      _
    $region15: #{tpu_custom_call.1} parent=1 // pred_check_branch
      %63 = sbr.rel (0) target = $region17
    $region16: #{tpu_custom_call.1} parent=1 // pred_region
      %s65 = ssub.s32 32, 32
      %66 = vsyncadd [#allocation3], %s65
      %s68 = sshll.u32 [#allocation5], 4
      %s69 = int_to_ptr.vmem [resolvable:$true] %s68
      %71 = dma.vmem_to_hbm [thread:$0]  %s69, 32, %s2, [#allocation3]
    $region17: #{tpu_custom_call.1} parent=1 // pred_fallthru
      _
    // Predicated region
    $region18: #{tpu_custom_call.1} parent=1 // pred_check
      _
    $region19: #{tpu_custom_call.1} parent=1 // pred_check_branch
      %73 = sbr.rel (0) target = $region21
    $region20: #{tpu_custom_call.1} parent=1 // pred_region
      %74 = dma.done [#allocation3], 32
    $region21: #{tpu_custom_call.1} parent=1 // pred_fallthru
      _
    %75 = vsyncpa [#allocation3], 1
    %76 = vsyncpa [#allocation4], 1

</llo_original>
